<compile_context>
chip_gen: v7x
topology: tpu7x:2x2x1
jax: 0.10.0
libtpu: 0.0.40
codegen_flags: <defaults>
</compile_context>

<pallas_src>
import functools
import math

import jax
import jax.numpy as jnp
from jax.experimental import pallas as pl
from jax.experimental.pallas import tpu as pltpu


_VMEM_LIMIT = 48 * 1024 * 1024     # explicit scoped-VMEM budget (<= v7x 64 MiB physical)


def _round_up(x, m):
    return (x + m - 1) // m * m


def _cdiv(a, b):
    return (a + b - 1) // b


# ----------------------------------------------------------------------------- #
# Pallas kernels
# ----------------------------------------------------------------------------- #
def _conv_kernel(x_ref, w_ref, b_ref, o_ref, acc_ref, *, n_kc, act):
    """Direct-ish conv block: (kh,kw) taps pre-flattened into K, kd taps contracted
    in-kernel over the full padded-D window.

    x_ref:   (1, Dp, bh, Wo, tk)   bf16 (kh,kw)-patches, full padded D axis
    w_ref:   (kd, K9, Cout)        bf16 whole weight panel, VMEM resident (single DMA)
    b_ref:   (1, Cout)             f32
    o_ref:   (1, Do, bh, Wo, Cout)
    acc_ref: (Do, bh*Wo, Cout)     f32 scratch
    """
    kc = pl.program_id(2)
    kd = w_ref.shape[0]
    do_out = o_ref.shape[1]
    bh, wo, tk = x_ref.shape[2], x_ref.shape[3], x_ref.shape[4]
    cout = o_ref.shape[4]

    @pl.when(kc == 0)
    def _():
        acc_ref[...] = jnp.zeros_like(acc_ref)

    for do in range(do_out):
        for a in range(kd):
            lhs = x_ref[0, do + a].reshape(bh * wo, tk)       # (M, tk) bf16
            if n_kc == 1:
                rhs = w_ref[a]                                # (K9, Cout)
            else:
                ks = pl.multiple_of(kc * tk, 128)
                rhs = w_ref[a, pl.ds(ks, tk), :]
            acc_ref[do] += jnp.dot(lhs, rhs, preferred_element_type=jnp.float32)

    @pl.when(kc == n_kc - 1)
    def _():
        r = acc_ref[...] + b_ref[...]                         # f32 epilogue
        if act == "lrelu":
            r = jnp.where(r >= 0, r, 0.2 * r)
        elif act == "relu":
            r = jnp.maximum(r, 0.0)
        elif act == "sigmoid":
            r = jax.nn.sigmoid(r)
        o_ref[0] = r.reshape(do_out, bh, wo, cout).astype(o_ref.dtype)


def _mm_kernel(a_ref, b_ref, bias_ref, o_ref, *, act):
    # Single-K-step matmul (B and bias VMEM resident, constant index maps).
    r = jnp.dot(a_ref[...], b_ref[...], preferred_element_type=jnp.float32)
    r = r + bias_ref[...]
    if act == "lrelu":
        r = jnp.where(r >= 0, r, 0.2 * r)
    elif act == "relu":
        r = jnp.maximum(r, 0.0)
    elif act == "sigmoid":
        r = jax.nn.sigmoid(r)
    o_ref[...] = r.astype(o_ref.dtype)


def _se_pool_kernel(x_ref, o_ref):
    # x_ref: (1, tp, Cf), o_ref: (1, 1, Cf) -- partial sums over the spatial axis.
    p = pl.program_id(1)

    @pl.when(p == 0)
    def _():
        o_ref[...] = jnp.zeros_like(o_ref)

    o_ref[...] += jnp.sum(x_ref[...].astype(jnp.float32), axis=1, keepdims=True)


def _se_scale_kernel(x_ref, g_ref, o_ref, *, act):
    # x_ref: (1, tp, Cf); g_ref: (1, 1, Cf) sigmoid gate; elementwise scale + act.
    y = x_ref[...].astype(jnp.float32) * g_ref[...].astype(jnp.float32)
    if act == "lrelu":
        y = jnp.where(y >= 0, y, 0.2 * y)
    elif act == "relu":
        y = jnp.maximum(y, 0.0)
    o_ref[...] = y.astype(o_ref.dtype)


def _rowsum_kernel(x_ref, o_ref):
    # partial per-row sums, accumulated over the lane-chunk grid axis.
    j = pl.program_id(1)

    @pl.when(j == 0)
    def _():
        o_ref[...] = jnp.zeros_like(o_ref)

    o_ref[...] += jnp.sum(x_ref[...], axis=1, keepdims=True)


def _sub_kernel(x_ref, m_ref, o_ref):
    o_ref[...] = x_ref[...] - m_ref[...]


# ----------------------------------------------------------------------------- #
# Wrappers
# ----------------------------------------------------------------------------- #
def pallas_matmul(a, b, bias=None, act="none", out_dtype=jnp.float32):
    """out = act(a @ b + bias).  bf16 MXU operands, f32 epilogue.
    B (and bias) are single VMEM-resident blocks; only M is tiled (partial edge
    blocks handled by Pallas, no padding/slicing round trips)."""
    M, K = a.shape
    K2, Nc = b.shape
    assert K == K2
    a = a.astype(jnp.bfloat16)
    b = b.astype(jnp.bfloat16)
    bias_arr = (jnp.zeros((Nc,), jnp.float32) if bias is None
                else bias.astype(jnp.float32)).reshape(1, Nc)

    tm = M if M <= 2048 else 2048
    return pl.pallas_call(
        functools.partial(_mm_kernel, act=act),
        out_shape=jax.ShapeDtypeStruct((M, Nc), out_dtype),
        grid=(pl.cdiv(M, tm),),
        in_specs=[
            pl.BlockSpec((tm, K), lambda i: (i, 0)),
            pl.BlockSpec((K, Nc), lambda i: (0, 0)),     # resident, fetched once
            pl.BlockSpec((1, Nc), lambda i: (0, 0)),
        ],
        out_specs=pl.BlockSpec((tm, Nc), lambda i: (i, 0)),
        compiler_params=pltpu.CompilerParams(
            dimension_semantics=("parallel",),
            vmem_limit_bytes=_VMEM_LIMIT),
    )(a, b, bias_arr)


def conv3d(x, w, b, stride=(1, 1, 1), padding=(1, 1, 1), act="none",
           out_dtype=jnp.bfloat16):
    """3-D conv.  (kh,kw) taps are flattened into the contraction dim in JAX (9x glue
    instead of 27x); the kd temporal taps ride on the in-kernel loop over the full
    padded-D window.  Weight panel is VMEM resident (single DMA)."""
    kd, kh, kw, cin, cout = w.shape
    sd, sh, sw = stride
    assert sd == 1, "temporal stride 1 only (as used by MEnet)"
    pads = tuple(p if isinstance(p, (tuple, list)) else (p, p) for p in padding)
    (pd0, pd1), (ph0, ph1), (pw0, pw1) = pads

    xp = jnp.pad(x.astype(jnp.bfloat16),
                 ((0, 0), (pd0, pd1), (ph0, ph1), (pw0, pw1), (0, 0)))
    N, Dp, Hp, Wp, _ = xp.shape
    Do = Dp - kd + 1
    Ho = (Hp - kh) // sh + 1
    Wo = (Wp - kw) // sw + 1

    # partial im2col: only (kh, kw); stride baked in; D axis left un-expanded.
    cols = []
    for bt in range(kh):
        for ct in range(kw):
            cols.append(xp[:, :, bt: bt + (Ho - 1) * sh + 1: sh,
                               ct: ct + (Wo - 1) * sw + 1: sw, :])
    xhw = jnp.concatenate(cols, axis=-1)           # (N, Dp, Ho, Wo, kh*kw*cin)
    K9 = kh * kw * cin
    wr = w.reshape(kd, K9, cout).astype(jnp.bfloat16)
    bias = (jnp.zeros((cout,), jnp.float32) if b is None
            else b.astype(jnp.float32)).reshape(1, cout)

    # Tile selection: prefer full-K blocks; chunk K by a multiple-of-128 divisor only
    # if a bh=1 full-K A block would blow the per-buffer budget.
    A_BUDGET = 4 << 20
    ROW_CAP = 2048
    full_bytes = Dp * Wo * K9 * 2
    if full_bytes <= A_BUDGET:
        tk = K9
        bh = max(1, min(Ho, A_BUDGET // full_bytes, max(1, ROW_CAP // Wo)))
    else:
        bh = 1
        tk = K9
        d = 128
        while d < K9:
            if K9 % d == 0 and Dp * Wo * d * 2 <= A_BUDGET:
                tk = d
            d += 128
    n_kc = K9 // tk

    out = pl.pallas_call(
        functools.partial(_conv_kernel, n_kc=n_kc, act=act),
        out_shape=jax.ShapeDtypeStruct((N, Do, Ho, Wo, cout), out_dtype),
        grid=(N, pl.cdiv(Ho, bh), n_kc),
        in_specs=[
            pl.BlockSpec((1, Dp, bh, Wo, tk), lambda n, ih, kc: (n, 0, ih, 0, kc)),
            pl.BlockSpec((kd, K9, cout), lambda n, ih, kc: (0, 0, 0)),   # resident
            pl.BlockSpec((1, cout), lambda n, ih, kc: (0, 0)),
        ],
        out_specs=pl.BlockSpec((1, Do, bh, Wo, cout),
                               lambda n, ih, kc: (n, 0, ih, 0, 0)),
        scratch_shapes=[pltpu.VMEM((Do, bh * Wo, cout), jnp.float32)],
        compiler_params=pltpu.CompilerParams(
            dimension_semantics=("parallel", "parallel", "arbitrary"),
            vmem_limit_bytes=_VMEM_LIMIT),
    )(xhw, wr, bias)
    return out


def conv_transpose3d_k344_s122_p111(x, w, b, out_dtype=jnp.bfloat16):
    """ConvTranspose3d(kernel=(3,4,4), stride=(1,2,2), padding=(1,1,1)) via sub-pixel
    phase decomposition: each (h,w) output parity is a stride-1 (3,2,2) conv (no
    zero-insertion -> no wasted MXU work).  Interleave via trailing parity axes +
    free reshape (no 7-D transpose)."""
    N, D, H, W, C = x.shape
    cout = w.shape[-1]
    pad_map = {0: (1, 0), 1: (0, 1)}     # even parity: left-pad; odd parity: right-pad
    phases = []
    for rh in (0, 1):
        row = []
        for rw in (0, 1):
            w_ph = w[:, rh::2, rw::2, :, :]                   # (3, 2, 2, cin, cout)
            y = conv3d(x, w_ph, b, stride=(1, 1, 1),
                       padding=((1, 1), pad_map[rh], pad_map[rw]),
                       act="none", out_dtype=out_dtype)       # (N, D, H, W, cout)
            row.append(y)
        phases.append(jnp.stack(row, axis=-2))                # (N, D, H, W, 2, cout)
    t = jnp.stack(phases, axis=3)                             # (N, D, H, 2, W, 2, cout)
    return t.reshape(N, D, 2 * H, 2 * W, cout)


def se_gate_act(x, w_se, b_se, act, out_dtype=jnp.bfloat16):
    """SEGating (global mean pool -> 1x1x1 conv -> sigmoid -> scale) + activation.
    Lane-dense tiled passes (C=64 folded onto 128 lanes); pooled reduction split so
    at least 2 parallel grid blocks exist for v7x's two TensorCores."""
    N, D, H, W, C = x.shape
    P = D * H * W
    fold = 2 if C < 128 else 1         # only C=64 occurs below 128
    Cf = C * fold
    Pf = P // fold
    xf = x.reshape(N, Pf, Cf)

    # ~1 MiB lane-dense blocks along the (folded) spatial axis
    tp = max(8, min(_round_up(Pf, 8), _round_up(max(8, (1 << 20) // (Cf * 2)), 8)))
    n_chunks = _cdiv(Pf, tp)
    S = 2 if n_chunks >= 2 else 1
    Pp = _round_up(Pf, S * tp)
    if Pp != Pf:
        xf = jnp.pad(xf, ((0, 0), (0, Pp - Pf), (0, 0)))

    # pass 1: pooled sum over the spatial axis
    xs = xf.reshape(N * S, Pp // S, Cf)
    pool_part = pl.pallas_call(
        _se_pool_kernel,
        out_shape=jax.ShapeDtypeStruct((N * S, 1, Cf), jnp.float32),
        grid=(N * S, Pp // S // tp),
        in_specs=[pl.BlockSpec((1, tp, Cf), lambda n, p: (n, p, 0))],
        out_specs=pl.BlockSpec((1, 1, Cf), lambda n, p: (n, 0, 0)),
        compiler_params=pltpu.CompilerParams(
            dimension_semantics=("parallel", "arbitrary"),
            vmem_limit_bytes=_VMEM_LIMIT),
    )(xs)
    pool = pool_part.reshape(N, S, Cf).sum(axis=1)            # (N, Cf)
    if fold > 1:
        pool = pool.reshape(N, fold, C).sum(axis=1)           # (N, C)
    pool = pool * (1.0 / P)

    # 1x1x1 conv + sigmoid on the MXU
    gate = pallas_matmul(pool, w_se, b_se, act="sigmoid", out_dtype=jnp.float32)
    if fold > 1:
        gate = jnp.tile(gate, (1, fold))                      # (N, Cf)

    # pass 2: scale + activation (tiled, lane-dense)
    out = pl.pallas_call(
        functools.partial(_se_scale_kernel, act=act),
        out_shape=jax.ShapeDtypeStruct((N, Pp, Cf), out_dtype),
        grid=(N, Pp // tp),
        in_specs=[pl.BlockSpec((1, tp, Cf), lambda n, p: (n, p, 0)),
                  pl.BlockSpec((1, 1, Cf), lambda n, p: (n, 0, 0))],
        out_specs=pl.BlockSpec((1, tp, Cf), lambda n, p: (n, p, 0)),
        compiler_params=pltpu.CompilerParams(
            dimension_semantics=("parallel", "parallel"),
            vmem_limit_bytes=_VMEM_LIMIT),
    )(xf, gate.reshape(N, 1, Cf))
    if Pp != Pf:
        out = out[:, :Pf, :]
    return out.reshape(N, D, H, W, C)


def mean_subtract_nchw(x):
    """x: (N, C, H, W) f32; subtract per-(N,C) spatial mean.  Two-pass, lane-tiled."""
    N, C, H, W = x.shape
    R, L = N * C, H * W
    xf = x.reshape(R, L).astype(jnp.float32)
    Rb = 8
    Rp = _round_up(R, Rb)
    tl = min(_round_up(L, 128), 4096)
    Lp = _round_up(L, tl)
    if (Rp, Lp) != (R, L):
        xf = jnp.pad(xf, ((0, Rp - R), (0, Lp - L)))

    sums = pl.pallas_call(
        _rowsum_kernel,
        out_shape=jax.ShapeDtypeStruct((Rp, 1), jnp.float32),
        grid=(Rp // Rb, Lp // tl),
        in_specs=[pl.BlockSpec((Rb, tl), lambda r, l: (r, l))],
        out_specs=pl.BlockSpec((Rb, 1), lambda r, l: (r, 0)),
        compiler_params=pltpu.CompilerParams(
            dimension_semantics=("parallel", "arbitrary"),
            vmem_limit_bytes=_VMEM_LIMIT),
    )(xf)
    mean = sums * (1.0 / L)

    out = pl.pallas_call(
        _sub_kernel,
        out_shape=jax.ShapeDtypeStruct((Rp, Lp), jnp.float32),
        grid=(Rp // Rb, Lp // tl),
        in_specs=[pl.BlockSpec((Rb, tl), lambda r, l: (r, l)),
                  pl.BlockSpec((Rb, 1), lambda r, l: (r, 0))],
        out_specs=pl.BlockSpec((Rb, tl), lambda r, l: (r, l)),
        compiler_params=pltpu.CompilerParams(
            dimension_semantics=("parallel", "parallel"),
            vmem_limit_bytes=_VMEM_LIMIT),
    )(xf, mean)
    return out[:R, :L].reshape(N, C, H, W)


# ----------------------------------------------------------------------------- #
# Parameters (deterministic, synthetic)
# ----------------------------------------------------------------------------- #
def _conv_w(key, kd, kh, kw, cin, cout):
    scale = 1.0 / math.sqrt(kd * kh * kw * cin)
    return jax.random.normal(key, (kd, kh, kw, cin, cout), jnp.float32) * scale


def _se_w(key, c):
    return jax.random.normal(key, (c, c), jnp.float32) / math.sqrt(c)


def init_params(key):
    nf = [512, 256, 128, 64]
    keys = iter(jax.random.split(key, 64))

    def stage(cin, cout, k=(3, 3, 3)):
        return {
            "w": _conv_w(next(keys), k[0], k[1], k[2], cin, cout),
            "b": jnp.zeros((cout,), jnp.float32),
            "w_se": _se_w(next(keys), cout),
            "b_se": jnp.zeros((cout,), jnp.float32),
        }

    p = {}
    # stand-in encoder (see TODO(synk) above)
    p["enc0"] = stage(3, 64)       # stride (1,2,2)
    p["enc1"] = stage(64, 64)      # stride 1
    p["enc2"] = stage(64, 128)     # stride (1,2,2)
    p["enc3"] = stage(128, 256)    # stride (1,2,2)
    p["enc4"] = stage(256, 512)    # stride 1

    # decoder (matches MEnet.__init__, joinType='concat' -> growth=2)
    p["dec0"] = stage(nf[0], nf[1])                       # Conv_3d 512 -> 256
    p["dec1"] = stage(nf[1] * 2, nf[2], k=(3, 4, 4))      # upConv3D 512 -> 128
    p["dec2"] = stage(nf[2] * 2, nf[3], k=(3, 4, 4))      # upConv3D 256 -> 64
    p["dec3"] = stage(nf[3] * 2, nf[3], k=(3, 4, 4))      # upConv3D 128 -> 64
    p["dec4"] = stage(nf[3], nf[3])                       # Conv_3d 64 -> 64

    # feature_fuse: Conv_2d(128, 64, kernel=1, bias=False)
    p["fuse_w"] = jax.random.normal(next(keys), (nf[2], nf[3]),
                                    jnp.float32) / math.sqrt(nf[2])
    return p


# ----------------------------------------------------------------------------- #
# MEnet forward
# ----------------------------------------------------------------------------- #
def _enc_stage(x, p, stride):
    y = conv3d(x, p["w"], p["b"], stride=stride, padding=(1, 1, 1))
    return se_gate_act(y, p["w_se"], p["b_se"], act="relu")


def _dec_conv3d_stage(x, p):
    y = conv3d(x, p["w"], p["b"], stride=(1, 1, 1), padding=(1, 1, 1))
    return se_gate_act(y, p["w_se"], p["b_se"], act="lrelu")


def _dec_upconv_stage(x, p):
    y = conv_transpose3d_k344_s122_p111(x, p["w"], p["b"])
    return se_gate_act(y, p["w_se"], p["b_se"], act="lrelu")


def menet_forward(params, lr_prev, lr_curr):
    """lr_prev, lr_curr: (N, 3, H, W) f32 (PyTorch NCHW). Returns (N, 64, H, W)."""
    prev = mean_subtract_nchw(lr_prev.astype(jnp.float32))
    curr = mean_subtract_nchw(lr_curr.astype(jnp.float32))

    prev = jnp.transpose(prev, (0, 2, 3, 1))   # NHWC
    curr = jnp.transpose(curr, (0, 2, 3, 1))

    # temporal stack: prev first, curr second -> (N, D=2, H, W, 3)
    image = jnp.stack([prev, curr], axis=1)

    # encoder (stand-in, shape-compatible with resnet_3D features)
    x0 = _enc_stage(image, params["enc0"], stride=(1, 2, 2))
    x1 = _enc_stage(x0, params["enc1"], stride=(1, 1, 1))
    x2 = _enc_stage(x1, params["enc2"], stride=(1, 2, 2))
    x3 = _enc_stage(x2, params["enc3"], stride=(1, 2, 2))
    x4 = _enc_stage(x3, params["enc4"], stride=(1, 1, 1))

    # decoder + skip concatenation (joinType='concat')
    dx3 = _dec_conv3d_stage(x4, params["dec0"])
    dx3 = jnp.concatenate([dx3, x3], axis=-1)
    dx2 = _dec_upconv_stage(dx3, params["dec1"])
    dx2 = jnp.concatenate([dx2, x2], axis=-1)
    dx1 = _dec_upconv_stage(dx2, params["dec2"])
    dx1 = jnp.concatenate([dx1, x1], axis=-1)
    dx0 = _dec_upconv_stage(dx1, params["dec3"])
    dxo = _dec_conv3d_stage(dx0, params["dec4"])

    # torch.cat(torch.unbind(dx_out, 2), 1): fold temporal dim into channels (frame-major)
    N, D, H, W, C = dxo.shape
    feat = jnp.transpose(dxo, (0, 2, 3, 1, 4)).reshape(N * H * W, D * C)

    # feature_fuse: 1x1 Conv2d (no bias) + LeakyReLU(0.2), fused in the Pallas matmul
    out = pallas_matmul(feat, params["fuse_w"], None, act="lrelu",
                        out_dtype=jnp.float32)
    out = out.reshape(N, H, W, -1)
    return jnp.transpose(out, (0, 3, 1, 2))    # back to NCHW


# ----------------------------------------------------------------------------- #
if __name__ == "__main__":
    key = jax.random.PRNGKey(0)
    k_prev, k_curr, k_par = jax.random.split(key, 3)

    B, C_in, H, W = 2, 3, 16, 16
    lr_prev = jax.random.normal(k_prev, (B, C_in, H, W), jnp.float32)
    lr_curr = jax.random.normal(k_curr, (B, C_in, H, W), jnp.float32)

    params = init_params(k_par)

    out = menet_forward(params, lr_prev, lr_curr)
    out = jax.block_until_ready(out)
    assert out.shape == (B, 64, H, W), out.shape
    assert bool(jnp.all(jnp.isfinite(out)))
    print("KERNEL_OK")
</pallas_src>

<mosaic_0001>
module attributes {stable_mosaic.version = 11 : i64} {
  func.func @_rowsum_kernel(%arg0: i32, %arg1: i32, %arg2: memref<8x256xf32, #tpu.memory_space<vmem>>, %arg3: memref<8x1xf32, #tpu.memory_space<vmem>>) attributes {dimension_semantics = [#tpu.dimension_semantics<parallel>, #tpu.dimension_semantics<arbitrary>], iteration_bounds = array<i64: 1, 1>, scalar_prefetch = 0 : i64, scratch_operands = 0 : i64, tpu.core_type = #tpu.core_type<tc>, window_params = [{transform_indices = @transform_0, window_bounds = array<i64: 8, 256>}, {transform_indices = @transform_1, window_bounds = array<i64: 8, 1>}]} {
    %c0_i32 = arith.constant 0 : i32
    %0 = arith.cmpi eq, %arg1, %c0_i32 : i32
    %1 = arith.extui %0 : i1 to i32
    %c0_i32_0 = arith.constant 0 : i32
    %2 = arith.cmpi ne, %1, %c0_i32_0 : i32
    scf.if %2 {
      %cst_6 = arith.constant 0.000000e+00 : f32
      %9 = vector.broadcast %cst_6 : f32 to vector<8x1xf32>
      %c0_7 = arith.constant 0 : index
      %c0_8 = arith.constant 0 : index
      %10 = vector.load %arg3[%c0_7, %c0_8] : memref<8x1xf32, #tpu.memory_space<vmem>>, vector<8x1xf32>
      tpu.vector_store %arg3[%c0_7, %c0_8], %9 {strides = array<i32>} : memref<8x1xf32, #tpu.memory_space<vmem>>, vector<8x1xf32>,
    } else {
    }
    %c0 = arith.constant 0 : index
    %c0_1 = arith.constant 0 : index
    %3 = vector.load %arg3[%c0, %c0_1] : memref<8x1xf32, #tpu.memory_space<vmem>>, vector<8x1xf32>
    %c0_2 = arith.constant 0 : index
    %c0_3 = arith.constant 0 : index
    %4 = vector.load %arg2[%c0_2, %c0_3] : memref<8x256xf32, #tpu.memory_space<vmem>>, vector<8x256xf32>
    %cst = arith.constant dense<0.000000e+00> : vector<8xf32>
    %5 = vector.multi_reduction <add>, %4, %cst [1] : vector<8x256xf32> to vector<8xf32>
    %6 = vector.shape_cast %5 : vector<8xf32> to vector<8x1xf32>
    %7 = arith.addf %3, %6 : vector<8x1xf32>
    %c0_4 = arith.constant 0 : index
    %c0_5 = arith.constant 0 : index
    %8 = vector.load %arg3[%c0_4, %c0_5] : memref<8x1xf32, #tpu.memory_space<vmem>>, vector<8x1xf32>
    tpu.vector_store %arg3[%c0_4, %c0_5], %7 {strides = array<i32>} : memref<8x1xf32, #tpu.memory_space<vmem>>, vector<8x1xf32>,
    return
  }
  func.func @transform_0(%arg0: i32, %arg1: i32) -> (i32, i32) {
    %c0_i32 = arith.constant 0 : i32
    return %arg0, %arg1 : i32, i32
  }
  func.func @transform_1(%arg0: i32, %arg1: i32) -> (i32, i32) {
    %c0_i32 = arith.constant 0 : i32
    %c0_i32_0 = arith.constant 0 : i32
    return %arg0, %c0_i32 : i32, i32
  }
}

</mosaic_0001>

<llo_original>
// kernel: tpu_custom_call.1
$region0: #{tpu_custom_call.1}
  #allocation0 [shape = 'u32[]', space=smem, size = 0x4, offset = 0x4, fixed_abs, tag = 'smem constant byte address 0x4 - core index']
  #allocation1 [shape = 'u32[144,128]{1,0:T(1,128)}', space=vmem, size = 0x12000, scoped, tag = 'internal scratch']
  %s0 = inlined_call_operand.hbm [shape: f32[8,256], index: 0, kind: input, shape index: {}]
  %s1 = inlined_call_operand.vmem [shape: f32[8,1], index: 1, kind: output, shape index: {}]
  %s2 = sld [smem:[#allocation0]]
  $region22: #{tpu_custom_call.1} parent=0
    _
  %s4 = ssub.s32 1, %s2
  %s5 = scalar_select 0, %s4, %s2
  $region1: #{tpu_custom_call.1} parent=0
    #allocation2 [shape = 'u8[8192]{0}', space=vmem, size = 0x2000, scoped, tag = 'input window, operand 0, single buffered']
    #allocation3 [shape = 's32[1]{0}', space=sflag, size = 0x4, scoped, tag = 'scoped memory for tpu_custom_call.1']
    %6 = vsyncpa [#allocation3], 0
    // Predicated region
    $region2: #{tpu_custom_call.1} parent=1 // pred_check
      _
    $region3: #{tpu_custom_call.1} parent=1 // pred_check_branch
      %8 = sbr.rel (0) target = $region5
    $region4: #{tpu_custom_call.1} parent=1 // pred_region
      %s10 = ssub.s32 256, 256
      %11 = vsyncadd [#allocation3], %s10
      %s13 = sshll.u32 [#allocation2], 4
      %s14 = int_to_ptr.vmem [resolvable:$true] %s13
      %16 = dma.hbm_to_vmem [thread:$0]  %s0, 256, %s14, [#allocation3]
    $region5: #{tpu_custom_call.1} parent=1 // pred_fallthru
      _
    // Predicated region
    $region6: #{tpu_custom_call.1} parent=1 // pred_check
      _
    $region7: #{tpu_custom_call.1} parent=1 // pred_check_branch
      %18 = sbr.rel (0) target = $region9
    $region8: #{tpu_custom_call.1} parent=1 // pred_region
      %19 = dma.done [#allocation3], 256
    $region9: #{tpu_custom_call.1} parent=1 // pred_fallthru
      _
    %p20 = scmp.eq.s32.totalorder 0, 0
    // Predicated region
    $region10: #{tpu_custom_call.1} parent=1 // pred_check
      %p21 = pneg %p20
    $region11: #{tpu_custom_call.1} parent=1 // pred_check_branch
      %23 = sbr.rel (%p21) target = $region13
    $region12: #{tpu_custom_call.1} parent=1 // pred_region
      %vm24 = vcmask 7168
      %25 = vst.msk [vmem:[%s1] sm:$0xff] %vm24, 0.0
    $region13: #{tpu_custom_call.1} parent=1 // pred_fallthru
      _
    %v26 = vld [vmem:[%s1] sm:$0xff]
    %v27 = vld [vmem:[#allocation2] sm:$0xff]
    %v28 = vld [vmem:[#allocation2 + $0x8] sm:$0xff]
    %v29 = vadd.f32 %v27, %v28
    %30 = vadd.xlane.f32.xlu0 %v29
    %v31 = vpop.xlane.xlu0 %30
    %v32 = vadd.f32 %v26, %v31
    %vm33 = vcmask 7168
    %34 = vst.msk [vmem:[%s1] sm:$0xff] %vm33, %v32
    // Predicated region
    $region14: #{tpu_custom_call.1} parent=1 // pred_check
      _
    $region15: #{tpu_custom_call.1} parent=1 // pred_check_branch
      %36 = sbr.rel (0) target = $region17
    $region16: #{tpu_custom_call.1} parent=1 // pred_region
      _
    $region17: #{tpu_custom_call.1} parent=1 // pred_fallthru
      _
    // Predicated region
    $region18: #{tpu_custom_call.1} parent=1 // pred_check
      _
    $region19: #{tpu_custom_call.1} parent=1 // pred_check_branch
      %38 = sbr.rel (0) target = $region21
    $region20: #{tpu_custom_call.1} parent=1 // pred_region
      _
    $region21: #{tpu_custom_call.1} parent=1 // pred_fallthru
      _
    %39 = vsyncpa [#allocation3], 1

</llo_original>
